<compile_context>
chip_gen: v7x
topology: tpu7x:2x2x1
jax: 0.10.0
libtpu: 0.0.40
codegen_flags: <defaults>
</compile_context>

<pallas_src>
import math
from functools import partial

import jax
import jax.numpy as jnp
from jax.experimental import pallas as pl
from jax.experimental.pallas import tpu as pltpu


def _round_up(x, m):
    return (x + m - 1) // m * m


def _pick_batch_tiling(B, align):
    """Pad the batch up to the block (never shrink the block): one block for
    small batch, 256-row blocks for large batch."""
    target = 256
    Bp = _round_up(max(B, 1), align)
    if Bp >= target:
        bm = target
        Bp = _round_up(Bp, bm)
    else:
        bm = Bp
    return Bp, bm


def _pick_gate_tile(H, weight_itemsize):
    """Column tile (in hidden units) for the gate/output axis of the weights.

    Returns H (whole weights, single-buffered, constant index_map) when Wx+Uh
    fit comfortably in scoped VMEM; otherwise a 128-multiple divisor of H so
    column tiles stream through a grid axis (required on v7x's 64 MiB VMEM
    for large H)."""
    budget = 24 << 20                       # headroom under 32 MiB scoped VMEM
    bytes_per_col = 2 * H * weight_itemsize  # one output column of Wx + Uh
    if 4 * H * bytes_per_col <= budget:
        return H
    for hn in (2048, 1024, 512, 256, 128):
        if H % hn == 0 and 2 * (4 * hn * bytes_per_col) <= budget:  # x2: dbl buf
            return hn
    # TODO(synk): H too large / not 128-divisible for clean column tiling;
    # untiled fallback may need vmem_limit_bytes raised.
    return H


def _interleave_gates(Wcat, H, hn):
    """(K, 4H) gate-contiguous [f|i|c|o]  ->  column-tile-interleaved layout
    where tile j (width 4*hn) holds [f_j|i_j|c_j|o_j] for hidden slice j, so
    each grid step's elementwise combine is local to its own tile."""
    if hn == H:
        return Wcat
    K = Wcat.shape[0]
    nJ = H // hn
    return jnp.transpose(Wcat.reshape(K, 4, nJ, hn), (0, 2, 1, 3)).reshape(K, 4 * H)


def _lstm_cell_kernel(x_ref, h_ref, c_ref, wx_ref, uh_ref, b_ref,
                      h_out_ref, c_out_ref):
    """One fused LSTM-cell step for one (batch block, gate-column tile)."""
    hn = c_ref.shape[-1]
    # Two MXU pushes (K = H each) with f32 accumulation; bias is one VPU add.
    gates = (jnp.dot(x_ref[...], wx_ref[...], preferred_element_type=jnp.float32)
             + jnp.dot(h_ref[...], uh_ref[...], preferred_element_type=jnp.float32)
             + b_ref[...])
    # Gate order inside this column tile: [f, i, c, o], each of width hn.
    f_t = jax.nn.sigmoid(gates[:, 0 * hn:1 * hn])
    i_t = jax.nn.sigmoid(gates[:, 1 * hn:2 * hn])
    cbar = jnp.tanh(gates[:, 2 * hn:3 * hn])
    o_t = jax.nn.sigmoid(gates[:, 3 * hn:4 * hn])

    c_new = f_t * c_ref[...] + i_t * cbar
    c_out_ref[...] = c_new
    h_out_ref[...] = o_t * jnp.tanh(c_new)


@partial(jax.jit, static_argnames=("hn",))
def _lstm_forward(x, h, c, wx, uh, bias, *, hn):
    """x, h: (B, H) in the weight dtype; c: (B, H) f32; wx/uh: (H, 4H); bias: (1, 4H) f32."""
    B, H = x.shape
    nJ = H // hn
    itemsize = jnp.dtype(x.dtype).itemsize
    align = 16 if itemsize < 4 else 8       # full sublane packing for bf16
    Bp, bm = _pick_batch_tiling(B, align)
    nB = Bp // bm

    pad = Bp - B
    if pad:
        x = jnp.pad(x, ((0, pad), (0, 0)))
        h = jnp.pad(h, ((0, pad), (0, 0)))
        c = jnp.pad(c, ((0, pad), (0, 0)))

    if nJ == 1:
        # Constant index_map -> single-buffer the resident weights/bias.
        wx_spec = pl.BlockSpec((H, 4 * hn), lambda j, i: (0, j),
                               pipeline_mode=pl.Buffered(1))
        uh_spec = pl.BlockSpec((H, 4 * hn), lambda j, i: (0, j),
                               pipeline_mode=pl.Buffered(1))
        b_spec = pl.BlockSpec((1, 4 * hn), lambda j, i: (0, j),
                              pipeline_mode=pl.Buffered(1))
        dims = ("parallel", "parallel")
    else:
        wx_spec = pl.BlockSpec((H, 4 * hn), lambda j, i: (0, j))
        uh_spec = pl.BlockSpec((H, 4 * hn), lambda j, i: (0, j))
        b_spec = pl.BlockSpec((1, 4 * hn), lambda j, i: (0, j))
        # Weight-column axis parallel (megacore streams disjoint weight halves);
        # batch axis arbitrary (avoids duplicating weight DMA per core).
        dims = ("parallel", "arbitrary")

    wbytes = (wx.size + uh.size) * jnp.dtype(wx.dtype).itemsize
    cost = pl.CostEstimate(
        flops=2 * Bp * (2 * H) * (4 * H),
        transcendentals=5 * Bp * H,
        bytes_accessed=wbytes + bias.size * 4
        + 2 * Bp * H * itemsize            # x + h in (weight dtype)
        + 3 * Bp * H * 4)                  # c in, h/c out (f32)

    h_new, c_new = pl.pallas_call(
        _lstm_cell_kernel,
        out_shape=(jax.ShapeDtypeStruct((Bp, H), jnp.float32),
                   jax.ShapeDtypeStruct((Bp, H), jnp.float32)),
        grid=(nJ, nB),                     # batch innermost: weights read once
        in_specs=[
            pl.BlockSpec((bm, H), lambda j, i: (i, 0)),    # x  (full K)
            pl.BlockSpec((bm, H), lambda j, i: (i, 0)),    # h  (full K)
            pl.BlockSpec((bm, hn), lambda j, i: (i, j)),   # c  (column tile, f32)
            wx_spec, uh_spec, b_spec,
        ],
        out_specs=(pl.BlockSpec((bm, hn), lambda j, i: (i, j)),
                   pl.BlockSpec((bm, hn), lambda j, i: (i, j))),
        compiler_params=pltpu.CompilerParams(dimension_semantics=dims),
        cost_estimate=cost,
    )(x, h, c, wx, uh, bias)

    if pad:
        h_new = h_new[:B]
        c_new = c_new[:B]
    return h_new, c_new


class BiDirectionalLSTMPallas:
    """JAX/Pallas re-implementation of the PyTorch BiDirectionalLSTM cell."""

    def __init__(self, input_size, hidden_size, key, param_dtype=jnp.bfloat16,
                 gate_tile=None):
        self.input_size = input_size
        self.hidden_size = hidden_size
        self.param_dtype = jnp.dtype(param_dtype)
        H = hidden_size

        stdv = 1.0 / math.sqrt(hidden_size)
        keys = jax.random.split(key, 12)

        def u(k, shape):
            return jax.random.uniform(k, shape, jnp.float32, -stdv, stdv)

        Wf, Wi, Wc, Wo = (u(keys[i], (H, H)) for i in range(4))
        Uf, Ui, Uc, Uo = (u(keys[4 + i], (H, H)) for i in range(4))
        bf, bi, bc, bo = (u(keys[8 + i], (H,)) for i in range(4))

        # f32, gate-contiguous layout [f|i|c|o] — used by the pure-JAX reference.
        self.Wx_f32 = jnp.concatenate([Wf, Wi, Wc, Wo], axis=1)     # (H, 4H)
        self.Uh_f32 = jnp.concatenate([Uf, Ui, Uc, Uo], axis=1)     # (H, 4H)
        self.b_f32 = jnp.concatenate([bf, bi, bc, bo])[None, :]     # (1, 4H)

        if gate_tile is None:
            gate_tile = _pick_gate_tile(H, self.param_dtype.itemsize)
        assert H % gate_tile == 0 and (gate_tile == H or gate_tile % 128 == 0)
        self.gate_tile = gate_tile

        # Kernel parameters: gate-interleaved per column tile, weight dtype
        # (bf16 by default), bias stays f32.
        self.Wx = _interleave_gates(self.Wx_f32, H, gate_tile).astype(self.param_dtype)
        self.Uh = _interleave_gates(self.Uh_f32, H, gate_tile).astype(self.param_dtype)
        self.bias = _interleave_gates(self.b_f32, H, gate_tile)

    def forward(self, x, hidden=None):
        B, H = x.shape
        assert H == self.hidden_size
        if not isinstance(hidden, tuple):
            # PyTorch uses zeros(1, H) + broadcasting; numerically identical.
            h = jnp.zeros((B, H), jnp.float32)
            c = jnp.zeros((B, H), jnp.float32)
        else:
            h, c = hidden
            h = jnp.broadcast_to(jnp.asarray(h, jnp.float32), (B, H))
            c = jnp.broadcast_to(jnp.asarray(c, jnp.float32), (B, H))

        h_new, c_new = _lstm_forward(
            x.astype(self.param_dtype),   # matmul inputs in weight dtype
            h.astype(self.param_dtype),
            c,                            # cell state stays f32
            self.Wx, self.Uh, self.bias, hn=self.gate_tile)
        output = h_new
        return output, (h_new, c_new)


def _reference_forward(module, x, hidden=None):
    """Pure-JAX reference of the PyTorch forward (emulating the kernel's
    matmul-input quantization to the parameter dtype)."""
    B = x.shape[0]
    H = module.hidden_size
    pd = module.param_dtype
    if not isinstance(hidden, tuple):
        h = jnp.zeros((B, H), jnp.float32)
        c = jnp.zeros((B, H), jnp.float32)
    else:
        h, c = hidden
        h = jnp.broadcast_to(jnp.asarray(h, jnp.float32), (B, H))
        c = jnp.broadcast_to(jnp.asarray(c, jnp.float32), (B, H))
    xq = x.astype(pd).astype(jnp.float32)
    hq = h.astype(pd).astype(jnp.float32)
    Wx = module.Wx_f32.astype(pd).astype(jnp.float32)
    Uh = module.Uh_f32.astype(pd).astype(jnp.float32)
    gates = (jnp.dot(xq, Wx, precision=jax.lax.Precision.HIGHEST)
             + jnp.dot(hq, Uh, precision=jax.lax.Precision.HIGHEST)
             + module.b_f32)
    f_t = jax.nn.sigmoid(gates[:, 0 * H:1 * H])
    i_t = jax.nn.sigmoid(gates[:, 1 * H:2 * H])
    cbar = jnp.tanh(gates[:, 2 * H:3 * H])
    o_t = jax.nn.sigmoid(gates[:, 3 * H:4 * H])
    c_new = f_t * c + i_t * cbar
    h_new = o_t * jnp.tanh(c_new)
    return h_new, (h_new, c_new)


if __name__ == "__main__":
    key = jax.random.PRNGKey(0)
    (k_param, k_x, k_h, k_c,
     k_param2, k_x2, k_h2, k_c2) = jax.random.split(key, 8)

    batch = 2
    input_vocab = 16     # only feeds the (unused) embedding in the original
    hidden = 32

    x = jax.random.normal(k_x, (batch, hidden), jnp.float32)
    h0 = jax.random.normal(k_h, (batch, hidden), jnp.float32)
    c0 = jax.random.normal(k_c, (batch, hidden), jnp.float32)

    # Default config: bf16 weights/inputs, f32 accumulation + state.
    mod = BiDirectionalLSTMPallas(input_vocab, hidden, k_param)
    out, (h_new, c_new) = mod.forward(x, (h0, c0))
    jax.block_until_ready((out, h_new, c_new))
    ref_out, (_, ref_c) = _reference_forward(mod, x, (h0, c0))
    assert jnp.allclose(out, ref_out, atol=1e-4, rtol=1e-4)
    assert jnp.allclose(c_new, ref_c, atol=1e-4, rtol=1e-4)

    # hidden-not-a-tuple path (PyTorch zero-init broadcast semantics).
    out0, _ = mod.forward(x, None)
    jax.block_until_ready(out0)
    ref0, _ = _reference_forward(mod, x, None)
    assert jnp.allclose(out0, ref0, atol=1e-4, rtol=1e-4)

    # Full-f32 parameter path (bit-close to the PyTorch forward).
    mod32 = BiDirectionalLSTMPallas(input_vocab, hidden, k_param,
                                    param_dtype=jnp.float32)
    out32, (_, c32) = mod32.forward(x, (h0, c0))
    jax.block_until_ready(out32)
    ref32, (_, ref_c32) = _reference_forward(mod32, x, (h0, c0))
    assert jnp.allclose(out32, ref32, atol=1e-3, rtol=1e-3)
    assert jnp.allclose(c32, ref_c32, atol=1e-3, rtol=1e-3)

    # Exercise the gate-column-tiled (nJ > 1) path at small shapes by forcing
    # gate_tile=128 with H=256 (validates the interleaved weight packing).
    hidden2, batch2 = 256, 4
    x2 = jax.random.normal(k_x2, (batch2, hidden2), jnp.float32)
    h2 = jax.random.normal(k_h2, (batch2, hidden2), jnp.float32)
    c2 = jax.random.normal(k_c2, (batch2, hidden2), jnp.float32)
    modT = BiDirectionalLSTMPallas(input_vocab, hidden2, k_param2,
                                   param_dtype=jnp.float32, gate_tile=128)
    outT, (hT, cT) = modT.forward(x2, (h2, c2))
    jax.block_until_ready((outT, hT, cT))
    refT, (_, ref_cT) = _reference_forward(modT, x2, (h2, c2))
    assert jnp.allclose(outT, refT, atol=1e-3, rtol=1e-3)
    assert jnp.allclose(cT, ref_cT, atol=1e-3, rtol=1e-3)

    print("KERNEL_OK")
</pallas_src>

<mosaic_0001>
module attributes {stable_mosaic.version = 11 : i64} {
  func.func @_lstm_cell_kernel(%arg0: i32, %arg1: i32, %arg2: memref<16x32xbf16, #tpu.memory_space<vmem>>, %arg3: memref<16x32xbf16, #tpu.memory_space<vmem>>, %arg4: memref<16x32xf32, #tpu.memory_space<vmem>>, %arg5: memref<32x128xbf16, #tpu.memory_space<vmem>>, %arg6: memref<32x128xbf16, #tpu.memory_space<vmem>>, %arg7: memref<1x128xf32, #tpu.memory_space<vmem>>, %arg8: memref<16x32xf32, #tpu.memory_space<vmem>>, %arg9: memref<16x32xf32, #tpu.memory_space<vmem>>) attributes {dimension_semantics = [#tpu.dimension_semantics<parallel>, #tpu.dimension_semantics<parallel>], iteration_bounds = array<i64: 1, 1>, scalar_prefetch = 0 : i64, scratch_operands = 0 : i64, tpu.core_type = #tpu.core_type<tc>, window_params = [{transform_indices = @transform_0, window_bounds = array<i64: 16, 32>}, {transform_indices = @transform_1, window_bounds = array<i64: 16, 32>}, {transform_indices = @transform_2, window_bounds = array<i64: 16, 32>}, {pipeline_mode = #tpu.pipeline_mode<synchronous>, transform_indices = @transform_3, window_bounds = array<i64: 32, 128>}, {pipeline_mode = #tpu.pipeline_mode<synchronous>, transform_indices = @transform_4, window_bounds = array<i64: 32, 128>}, {pipeline_mode = #tpu.pipeline_mode<synchronous>, transform_indices = @transform_5, window_bounds = array<i64: 1, 128>}, {transform_indices = @transform_6, window_bounds = array<i64: 16, 32>}, {transform_indices = @transform_7, window_bounds = array<i64: 16, 32>}]} {
    %c0 = arith.constant 0 : index
    %c0_0 = arith.constant 0 : index
    %0 = vector.load %arg2[%c0, %c0_0] : memref<16x32xbf16, #tpu.memory_space<vmem>>, vector<16x32xbf16>
    %c0_1 = arith.constant 0 : index
    %c0_2 = arith.constant 0 : index
    %1 = vector.load %arg5[%c0_1, %c0_2] : memref<32x128xbf16, #tpu.memory_space<vmem>>, vector<32x128xbf16>
    %cst = arith.constant dense<0.000000e+00> : vector<16x128xf32>
    %2 = tpu.matmul %0, %1, %cst {dimension_numbers = #tpu.dot_dimension_numbers<[1], [0], [0], [1], [0, 0, 1, 1], [], []>} : vector<16x32xbf16>, vector<32x128xbf16>, vector<16x128xf32> -> vector<16x128xf32>
    %c0_3 = arith.constant 0 : index
    %c0_4 = arith.constant 0 : index
    %3 = vector.load %arg3[%c0_3, %c0_4] : memref<16x32xbf16, #tpu.memory_space<vmem>>, vector<16x32xbf16>
    %c0_5 = arith.constant 0 : index
    %c0_6 = arith.constant 0 : index
    %4 = vector.load %arg6[%c0_5, %c0_6] : memref<32x128xbf16, #tpu.memory_space<vmem>>, vector<32x128xbf16>
    %cst_7 = arith.constant dense<0.000000e+00> : vector<16x128xf32>
    %5 = tpu.matmul %3, %4, %cst_7 {dimension_numbers = #tpu.dot_dimension_numbers<[1], [0], [0], [1], [0, 0, 1, 1], [], []>} : vector<16x32xbf16>, vector<32x128xbf16>, vector<16x128xf32> -> vector<16x128xf32>
    %6 = arith.addf %2, %5 : vector<16x128xf32>
    %c0_8 = arith.constant 0 : index
    %c0_9 = arith.constant 0 : index
    %7 = vector.load %arg7[%c0_8, %c0_9] : memref<1x128xf32, #tpu.memory_space<vmem>>, vector<1x128xf32>
    %8 = vector.broadcast %7 : vector<1x128xf32> to vector<16x128xf32>
    %9 = arith.addf %6, %8 : vector<16x128xf32>
    %10 = vector.extract_strided_slice %9 {offsets = [0, 0], sizes = [16, 32], strides = [1, 1]} : vector<16x128xf32> to vector<16x32xf32>
    %11 = arith.negf %10 : vector<16x32xf32>
    %12 = math.exp %11 : vector<16x32xf32>
    %cst_10 = arith.constant 1.000000e+00 : f32
    %13 = vector.broadcast %cst_10 : f32 to vector<16x32xf32>
    %14 = arith.addf %13, %12 : vector<16x32xf32>
    %15 = arith.divf %13, %14 : vector<16x32xf32>
    %16 = vector.extract_strided_slice %9 {offsets = [0, 32], sizes = [16, 32], strides = [1, 1]} : vector<16x128xf32> to vector<16x32xf32>
    %17 = arith.negf %16 : vector<16x32xf32>
    %18 = math.exp %17 : vector<16x32xf32>
    %cst_11 = arith.constant 1.000000e+00 : f32
    %19 = vector.broadcast %cst_11 : f32 to vector<16x32xf32>
    %20 = arith.addf %19, %18 : vector<16x32xf32>
    %21 = arith.divf %19, %20 : vector<16x32xf32>
    %22 = vector.extract_strided_slice %9 {offsets = [0, 64], sizes = [16, 32], strides = [1, 1]} : vector<16x128xf32> to vector<16x32xf32>
    %23 = math.tanh %22 : vector<16x32xf32>
    %24 = vector.extract_strided_slice %9 {offsets = [0, 96], sizes = [16, 32], strides = [1, 1]} : vector<16x128xf32> to vector<16x32xf32>
    %25 = arith.negf %24 : vector<16x32xf32>
    %26 = math.exp %25 : vector<16x32xf32>
    %cst_12 = arith.constant 1.000000e+00 : f32
    %27 = vector.broadcast %cst_12 : f32 to vector<16x32xf32>
    %28 = arith.addf %27, %26 : vector<16x32xf32>
    %29 = arith.divf %27, %28 : vector<16x32xf32>
    %c0_13 = arith.constant 0 : index
    %c0_14 = arith.constant 0 : index
    %30 = vector.load %arg4[%c0_13, %c0_14] : memref<16x32xf32, #tpu.memory_space<vmem>>, vector<16x32xf32>
    %31 = arith.mulf %15, %30 : vector<16x32xf32>
    %32 = arith.mulf %21, %23 : vector<16x32xf32>
    %33 = arith.addf %31, %32 : vector<16x32xf32>
    %c0_15 = arith.constant 0 : index
    %c0_16 = arith.constant 0 : index
    %34 = vector.load %arg9[%c0_15, %c0_16] : memref<16x32xf32, #tpu.memory_space<vmem>>, vector<16x32xf32>
    tpu.vector_store %arg9[%c0_15, %c0_16], %33 {strides = array<i32>} : memref<16x32xf32, #tpu.memory_space<vmem>>, vector<16x32xf32>,
    %35 = math.tanh %33 : vector<16x32xf32>
    %36 = arith.mulf %29, %35 : vector<16x32xf32>
    %c0_17 = arith.constant 0 : index
    %c0_18 = arith.constant 0 : index
    %37 = vector.load %arg8[%c0_17, %c0_18] : memref<16x32xf32, #tpu.memory_space<vmem>>, vector<16x32xf32>
    tpu.vector_store %arg8[%c0_17, %c0_18], %36 {strides = array<i32>} : memref<16x32xf32, #tpu.memory_space<vmem>>, vector<16x32xf32>,
    return
  }
  func.func @transform_0(%arg0: i32, %arg1: i32) -> (i32, i32) {
    %c0_i32 = arith.constant 0 : i32
    %c0_i32_0 = arith.constant 0 : i32
    return %arg1, %c0_i32 : i32, i32
  }
  func.func @transform_1(%arg0: i32, %arg1: i32) -> (i32, i32) {
    %c0_i32 = arith.constant 0 : i32
    %c0_i32_0 = arith.constant 0 : i32
    return %arg1, %c0_i32 : i32, i32
  }
  func.func @transform_2(%arg0: i32, %arg1: i32) -> (i32, i32) {
    %c0_i32 = arith.constant 0 : i32
    return %arg1, %arg0 : i32, i32
  }
  func.func @transform_3(%arg0: i32, %arg1: i32) -> (i32, i32) {
    %c0_i32 = arith.constant 0 : i32
    %c0_i32_0 = arith.constant 0 : i32
    return %c0_i32, %arg0 : i32, i32
  }
  func.func @transform_4(%arg0: i32, %arg1: i32) -> (i32, i32) {
    %c0_i32 = arith.constant 0 : i32
    %c0_i32_0 = arith.constant 0 : i32
    return %c0_i32, %arg0 : i32, i32
  }
  func.func @transform_5(%arg0: i32, %arg1: i32) -> (i32, i32) {
    %c0_i32 = arith.constant 0 : i32
    %c0_i32_0 = arith.constant 0 : i32
    return %c0_i32, %arg0 : i32, i32
  }
  func.func @transform_6(%arg0: i32, %arg1: i32) -> (i32, i32) {
    %c0_i32 = arith.constant 0 : i32
    return %arg1, %arg0 : i32, i32
  }
  func.func @transform_7(%arg0: i32, %arg1: i32) -> (i32, i32) {
    %c0_i32 = arith.constant 0 : i32
    return %arg1, %arg0 : i32, i32
  }
}

</mosaic_0001>

<llo_original>
// kernel: _lstm_forward.1
$region0: #{_lstm_forward.1}
  #allocation0 [shape = 'u32[]', space=smem, size = 0x4, offset = 0x4, fixed_abs, tag = 'smem constant byte address 0x4 - core index']
  #allocation1 [shape = 'u32[144,128]{1,0:T(1,128)}', space=vmem, size = 0x12000, scoped, tag = 'internal scratch']
  %s0 = inlined_call_operand.vmem [shape: bf16[16,32], index: 0, kind: input, shape index: {}]
  %s1 = inlined_call_operand.vmem [shape: bf16[16,32], index: 1, kind: input, shape index: {}]
  %s2 = inlined_call_operand.vmem [shape: f32[16,32], index: 2, kind: input, shape index: {}]
  %s3 = inlined_call_operand.vmem [shape: bf16[32,128], index: 3, kind: input, shape index: {}]
  %s4 = inlined_call_operand.vmem [shape: bf16[32,128], index: 4, kind: input, shape index: {}]
  %s5 = inlined_call_operand.vmem [shape: f32[1,128], index: 5, kind: input, shape index: {}]
  %s6 = inlined_call_operand.vmem [shape: f32[16,32], index: 6, kind: output, shape index: {0}]
  %s7 = inlined_call_operand.vmem [shape: f32[16,32], index: 7, kind: output, shape index: {1}]
  %8 = xla_tuple %s6, %s7
  %s9 = sld [smem:[#allocation0]]
  $region42: #{_lstm_forward.1} parent=0
    _
  %s11 = ssub.s32 1, %s9
  %s12 = scalar_select 0, %s11, %s9
  // Predicated region
  $region2: #{_lstm_forward.1} parent=0 // pred_check
    _
  $region3: #{_lstm_forward.1} parent=0 // pred_check_branch
    %14 = sbr.rel (0) target = $region5
  $region4: #{_lstm_forward.1} parent=0 // pred_region
    _
  $region5: #{_lstm_forward.1} parent=0 // pred_fallthru
    _
  // Predicated region
  $region6: #{_lstm_forward.1} parent=0 // pred_check
    _
  $region7: #{_lstm_forward.1} parent=0 // pred_check_branch
    %16 = sbr.rel (0) target = $region9
  $region8: #{_lstm_forward.1} parent=0 // pred_region
    _
  $region9: #{_lstm_forward.1} parent=0 // pred_fallthru
    _
  // Predicated region
  $region10: #{_lstm_forward.1} parent=0 // pred_check
    _
  $region11: #{_lstm_forward.1} parent=0 // pred_check_branch
    %18 = sbr.rel (0) target = $region13
  $region12: #{_lstm_forward.1} parent=0 // pred_region
    _
  $region13: #{_lstm_forward.1} parent=0 // pred_fallthru
    _
  // Predicated region
  $region14: #{_lstm_forward.1} parent=0 // pred_check
    _
  $region15: #{_lstm_forward.1} parent=0 // pred_check_branch
    %20 = sbr.rel (0) target = $region17
  $region16: #{_lstm_forward.1} parent=0 // pred_region
    _
  $region17: #{_lstm_forward.1} parent=0 // pred_fallthru
    _
  // Predicated region
  $region18: #{_lstm_forward.1} parent=0 // pred_check
    _
  $region19: #{_lstm_forward.1} parent=0 // pred_check_branch
    %22 = sbr.rel (0) target = $region21
  $region20: #{_lstm_forward.1} parent=0 // pred_region
    _
  $region21: #{_lstm_forward.1} parent=0 // pred_fallthru
    _
  // Predicated region
  $region22: #{_lstm_forward.1} parent=0 // pred_check
    _
  $region23: #{_lstm_forward.1} parent=0 // pred_check_branch
    %24 = sbr.rel (0) target = $region25
  $region24: #{_lstm_forward.1} parent=0 // pred_region
    _
  $region25: #{_lstm_forward.1} parent=0 // pred_fallthru
    _
  %v26 = vld [vmem:[%s0] sm:$0xf]
  %v27 = vld [vmem:[%s0 + $0x4] sm:$0xf]
  %v28 = vld [vmem:[%s3] sm:$0xf]
  %v29 = vld [vmem:[%s3 + $0x4] sm:$0xf]
  %v30 = vld [vmem:[%s3 + $0x8] sm:$0xf]
  %v31 = vld [vmem:[%s3 + $0xc] sm:$0xf]
  %v32 = vld [vmem:[%s1] sm:$0xf]
  %v33 = vld [vmem:[%s1 + $0x4] sm:$0xf]
  %v34 = vld [vmem:[%s4] sm:$0xf]
  %v35 = vld [vmem:[%s4 + $0x4] sm:$0xf]
  %v36 = vld [vmem:[%s4 + $0x8] sm:$0xf]
  %v37 = vld [vmem:[%s4 + $0xc] sm:$0xf]
  %v40 = vunpack.c.l.b16 %v32
  %v41 = vunpack.c.l.b16 %v33
  %v42 = vpack.c.b16 %v41, %v40
  %v47 = vunpack.c.l.b16 %v34
  %v48 = vunpack.c.l.b16 %v35
  %v49 = vunpack.c.l.b16 %v36
  %v50 = vunpack.c.l.b16 %v37
  %v51 = vpack.c.b16 %v48, %v47
  %v52 = vpack.c.b16 %v50, %v49
  %vm55 = vcmask 261120
  %v57 = vsel %vm55, %v42, 0
  %59 = vmatprep.subr.bf16.mxu0 0
  %60 = vmatpush1.bf16.msra.mxu0 %v51
  %61 = vmatprep.subr.bf16.mxu0 0
  %62 = vmatpush1.bf16.msra.mxu0 %v52
  %63 = vmatprep.subr.bf16.mxu0 0
  %64 = vmatpush1.bf16.msra.mxu0 0
  %65 = vmatprep.subr.bf16.mxu0 0
  %66 = vmatpush1.bf16.msra.mxu0 0
  %67 = vmatprep.subr.bf16.mxu0 0
  %68 = vmatpush1.bf16.msra.mxu0 0
  %69 = vmatprep.subr.bf16.mxu0 0
  %70 = vmatpush1.bf16.msra.mxu0 0
  %71 = vmatprep.subr.bf16.mxu0 0
  %72 = vmatpush1.bf16.msra.mxu0 0
  %73 = vmatprep.subr.bf16.mxu0 0
  %74 = vmatpush1.bf16.msra.mxu0 0
  %75 = vmatprep.subr.bf16.mxu0 0
  %76 = vmatpush1.bf16.msra.mxu0 0
  %77 = vmatprep.subr.bf16.mxu0 0
  %78 = vmatpush1.bf16.msra.mxu0 0
  %79 = vmatprep.subr.bf16.mxu0 0
  %80 = vmatpush1.bf16.msra.mxu0 0
  %81 = vmatprep.subr.bf16.mxu0 0
  %82 = vmatpush1.bf16.msra.mxu0 0
  %83 = vmatprep.subr.bf16.mxu0 0
  %84 = vmatpush1.bf16.msra.mxu0 0
  %85 = vmatprep.subr.bf16.mxu0 0
  %86 = vmatpush1.bf16.msra.mxu0 0
  %87 = vmatprep.subr.bf16.mxu0 0
  %88 = vmatpush1.bf16.msra.mxu0 0
  %89 = vmatprep.subr.bf16.mxu0 0
  %90 = vmatpush1.bf16.msra.mxu0 0
  %91 = vmatprep.mubr.bf16.mxu0 0
  %92 = vmatmul.mubr.bf16.gmra.mrb[0].mxu0 %v57
  %v93 = vpop.f32.mrb[0].mxu0
  %v94 = vadd.f32 0.0, %v93
  %v95 = vpop.f32.mrb[0].mxu0
  %v96 = vpop.f32.mrb[0].mxu0
  %v97 = vadd.f32 0.0, %v96
  %v98 = vpop.f32.mrb[0].mxu0
  %99 = vdwg.mxu0
  %v102 = vunpack.c.l.b16 %v26
  %v103 = vunpack.c.l.b16 %v27
  %v104 = vpack.c.b16 %v103, %v102
  %v109 = vunpack.c.l.b16 %v28
  %v110 = vunpack.c.l.b16 %v29
  %v111 = vunpack.c.l.b16 %v30
  %v112 = vunpack.c.l.b16 %v31
  %v113 = vpack.c.b16 %v110, %v109
  %v114 = vpack.c.b16 %v112, %v111
  %v118 = vsel %vm55, %v104, 0
  %120 = vmatprep.subr.bf16.mxu0 0
  %121 = vmatpush1.bf16.msra.mxu0 %v113
  %122 = vmatprep.subr.bf16.mxu0 0
  %123 = vmatpush1.bf16.msra.mxu0 %v114
  %124 = vmatprep.subr.bf16.mxu0 0
  %125 = vmatpush1.bf16.msra.mxu0 0
  %126 = vmatprep.subr.bf16.mxu0 0
  %127 = vmatpush1.bf16.msra.mxu0 0
  %128 = vmatprep.subr.bf16.mxu0 0
  %129 = vmatpush1.bf16.msra.mxu0 0
  %130 = vmatprep.subr.bf16.mxu0 0
  %131 = vmatpush1.bf16.msra.mxu0 0
  %132 = vmatprep.subr.bf16.mxu0 0
  %133 = vmatpush1.bf16.msra.mxu0 0
  %134 = vmatprep.subr.bf16.mxu0 0
  %135 = vmatpush1.bf16.msra.mxu0 0
  %136 = vmatprep.subr.bf16.mxu0 0
  %137 = vmatpush1.bf16.msra.mxu0 0
  %138 = vmatprep.subr.bf16.mxu0 0
  %139 = vmatpush1.bf16.msra.mxu0 0
  %140 = vmatprep.subr.bf16.mxu0 0
  %141 = vmatpush1.bf16.msra.mxu0 0
  %142 = vmatprep.subr.bf16.mxu0 0
  %143 = vmatpush1.bf16.msra.mxu0 0
  %144 = vmatprep.subr.bf16.mxu0 0
  %145 = vmatpush1.bf16.msra.mxu0 0
  %146 = vmatprep.subr.bf16.mxu0 0
  %147 = vmatpush1.bf16.msra.mxu0 0
  %148 = vmatprep.subr.bf16.mxu0 0
  %149 = vmatpush1.bf16.msra.mxu0 0
  %150 = vmatprep.subr.bf16.mxu0 0
  %151 = vmatpush1.bf16.msra.mxu0 0
  %152 = vmatprep.mubr.bf16.mxu0 0
  %153 = vmatmul.mubr.bf16.gmra.mrb[0].mxu0 %v118
  %v154 = vpop.f32.mrb[0].mxu0
  %v155 = vadd.f32 %v94, %v154
  %v156 = vpop.f32.mrb[0].mxu0
  %v157 = vpop.f32.mrb[0].mxu0
  %v158 = vadd.f32 %v97, %v157
  %v159 = vpop.f32.mrb[0].mxu0
  %160 = vdwg.mxu0
  %v161 = vld [vmem:[%s5] sm:$0x1]
  %v163 = vlaneseq
  %v164 = vshrl.u32 %v163, 7
  %v165 = vsub.s32 0, %v164
  %v166 = vrot.slane %v161, %v165
  %v168 = vadd.f32 %v155, %v166
  %v169 = vadd.f32 %v158, %v166
  %v170 = vxor.u32 %v168, 2147483648
  %v171 = vxor.u32 %v169, 2147483648
  %v172 = vmul.f32 %v170, 1.442695
  %v173 = vpow.pop %v172
  %v174 = vmul.f32 %v171, 1.442695
  %v175 = vpow.pop %v174
  %v176 = vadd.f32 %v173, 1.0
  %v177 = vadd.f32 %v175, 1.0
  %v178 = vrcp.pop %v176
  %v179 = vmul.f32 1.0, %v178
  %v180 = vrcp.pop %v177
  %v181 = vmul.f32 1.0, %v180
  %v182 = vtanh.pop %v168
  %v183 = vtanh.pop %v169
  %v184 = vld [vmem:[%s2] sm:$0xff]
  %v185 = vld [vmem:[%s2 + $0x8] sm:$0xff]
  %v186 = vmul.f32 %v179, %v184
  %v187 = vmul.f32 %v181, %v185
  %190 = vrot.lane.b32.xlu0 %v182, 96
  %v191 = vpop.permute.xlu0 %190
  %192 = vrot.lane.b32.xlu0 %v183, 96
  %v193 = vpop.permute.xlu0 %192
  %v196 = vmul.f32 %v179, %v191
  %v197 = vmul.f32 %v181, %v193
  %200 = vrot.lane.b32.xlu0 %v196, 96
  %v201 = vpop.permute.xlu0 %200
  %202 = vrot.lane.b32.xlu0 %v197, 96
  %v203 = vpop.permute.xlu0 %202
  %v206 = vadd.f32 %v186, %v201
  %v207 = vadd.f32 %v187, %v203
  %208 = vst.msk [vmem:[%s7] sm:$0xff] %vm55, %v206
  %209 = vst.msk [vmem:[%s7 + $0x8] sm:$0xff] %vm55, %v207
  %v210 = vtanh.pop %v206
  %v211 = vtanh.pop %v207
  %214 = vrot.lane.b32.xlu0 %v210, 96
  %v215 = vpop.permute.xlu0 %214
  %216 = vrot.lane.b32.xlu0 %v211, 96
  %v217 = vpop.permute.xlu0 %216
  %v220 = vmul.f32 %v179, %v215
  %v221 = vmul.f32 %v181, %v217
  %224 = vrot.lane.b32.xlu0 %v220, 32
  %v225 = vpop.permute.xlu0 %224
  %226 = vrot.lane.b32.xlu0 %v221, 32
  %v227 = vpop.permute.xlu0 %226
  %230 = vst.msk [vmem:[%s6] sm:$0xff] %vm55, %v225
  %231 = vst.msk [vmem:[%s6 + $0x8] sm:$0xff] %vm55, %v227
  // Predicated region
  $region26: #{_lstm_forward.1} parent=0 // pred_check
    _
  $region27: #{_lstm_forward.1} parent=0 // pred_check_branch
    %233 = sbr.rel (0) target = $region29
  $region28: #{_lstm_forward.1} parent=0 // pred_region
    _
  $region29: #{_lstm_forward.1} parent=0 // pred_fallthru
    _
  // Predicated region
  $region30: #{_lstm_forward.1} parent=0 // pred_check
    _
  $region31: #{_lstm_forward.1} parent=0 // pred_check_branch
    %235 = sbr.rel (0) target = $region33
  $region32: #{_lstm_forward.1} parent=0 // pred_region
    _
  $region33: #{_lstm_forward.1} parent=0 // pred_fallthru
    _
  // Predicated region
  $region34: #{_lstm_forward.1} parent=0 // pred_check
    _
  $region35: #{_lstm_forward.1} parent=0 // pred_check_branch
    %237 = sbr.rel (0) target = $region37
  $region36: #{_lstm_forward.1} parent=0 // pred_region
    _
  $region37: #{_lstm_forward.1} parent=0 // pred_fallthru
    _
  // Predicated region
  $region38: #{_lstm_forward.1} parent=0 // pred_check
    _
  $region39: #{_lstm_forward.1} parent=0 // pred_check_branch
    %239 = sbr.rel (0) target = $region41
  $region40: #{_lstm_forward.1} parent=0 // pred_region
    _
  $region41: #{_lstm_forward.1} parent=0 // pred_fallthru
    _

</llo_original>
